<compile_context>
chip_gen: v6e
topology: v6e:2x2x1
jax: 0.10.0
libtpu: 0.0.40
codegen_flags: <defaults>
</compile_context>

<pallas_src>
import jax
import jax.numpy as jnp
from jax.experimental import pallas as pl
from jax.experimental.pallas import tpu as pltpu


def _round_up(x, m):
    return (x + m - 1) // m * m


# --------------------------------------------------------------------------- #
# Conv2d + MFM  (type=1, the module default)
# --------------------------------------------------------------------------- #
def mfm_conv_kernel(p_ref, wa_ref, wb_ref, ba_ref, bb_ref, o_ref):
    """One (image, pixel-tile) grid step.

    p_ref : (1, K, THW)     im2col'd input slab, pixels on lanes
    wa_ref: (Cout, K)       first  MFM half of the conv weights
    wb_ref: (Cout, K)       second MFM half of the conv weights
    ba_ref: (Cout, 1)       bias, first half  (f32)
    bb_ref: (Cout, 1)       bias, second half (f32)
    o_ref : (1, Cout, THW)  lane-dense output slab (already NCHW-flat)
    """
    p = p_ref[0]                                   # (K, THW); no copy/relayout
    a = jnp.dot(wa_ref[...], p, preferred_element_type=jnp.float32) + ba_ref[...]
    b = jnp.dot(wb_ref[...], p, preferred_element_type=jnp.float32) + bb_ref[...]
    # MFM: pure per-lane VPU max (halves were split in the wrapper).
    o_ref[0] = jnp.maximum(a, b).astype(o_ref.dtype)


def mfm_conv_forward(x_nchw, w_oihw, bias, *, stride=1, padding=1,
                     compute_dtype=None, max_hw_tile=1024):
    """PyTorch-style interface: x (B, Cin, H, W) -> (B, Cout, Ho, Wo)."""
    B, Cin, H, W = x_nchw.shape
    Cout2, _, KH, KW = w_oihw.shape
    Cout = Cout2 // 2
    out_dtype = x_nchw.dtype

    Hp, Wp = H + 2 * padding, W + 2 * padding
    Ho = (Hp - KH) // stride + 1
    Wo = (Wp - KW) // stride + 1
    HW = Ho * Wo
    K = KH * KW * Cin

    # ---- wrapper-side layout plumbing (plain JAX, done once) ----------------
    x_pad = jnp.pad(x_nchw,
                    ((0, 0), (0, 0), (padding, padding), (padding, padding)))

    # im2col built directly in (B, K, HW) with k ordered (kh, kw, cin):
    # pixels land on the lane axis; no extra transposes needed.
    cols = [
        x_pad[:, :,
              kh:kh + (Ho - 1) * stride + 1:stride,
              kw:kw + (Wo - 1) * stride + 1:stride].reshape(B, Cin, HW)
        for kh in range(KH) for kw in range(KW)
    ]
    patches_t = jnp.concatenate(cols, axis=1)            # (B, K, HW)

    # Weights -> (2*Cout, K) matching the (kh, kw, cin) order; pre-split the
    # MFM halves (PyTorch invariant: first Cout output channels are branch a).
    wmat = jnp.transpose(w_oihw, (0, 2, 3, 1)).reshape(Cout2, K)
    w_a, w_b = wmat[:Cout], wmat[Cout:]
    b_a = bias[:Cout].reshape(Cout, 1).astype(jnp.float32)
    b_b = bias[Cout:].reshape(Cout, 1).astype(jnp.float32)

    if compute_dtype is not None:                  # e.g. bf16 for v6e/v7x MXU
        patches_t = patches_t.astype(compute_dtype)
        w_a = w_a.astype(compute_dtype)
        w_b = w_b.astype(compute_dtype)

    # Lane-dense tiling of the pixel axis (multiple of 128, capped for VMEM).
    LANE = 128
    thw = min(_round_up(HW, LANE), max_hw_tile)
    hw_pad = _round_up(HW, thw)
    if hw_pad != HW:
        patches_t = jnp.pad(patches_t, ((0, 0), (0, 0), (0, hw_pad - HW)))

    grid = (B, hw_pad // thw)

    out = pl.pallas_call(
        mfm_conv_kernel,
        out_shape=jax.ShapeDtypeStruct((B, Cout, hw_pad), out_dtype),
        grid=grid,
        in_specs=[
            pl.BlockSpec((1, K, thw), lambda b, t: (b, 0, t)),
            pl.BlockSpec((Cout, K), lambda b, t: (0, 0)),
            pl.BlockSpec((Cout, K), lambda b, t: (0, 0)),
            pl.BlockSpec((Cout, 1), lambda b, t: (0, 0)),
            pl.BlockSpec((Cout, 1), lambda b, t: (0, 0)),
        ],
        out_specs=pl.BlockSpec((1, Cout, thw), lambda b, t: (b, 0, t)),
        compiler_params=pltpu.CompilerParams(
            dimension_semantics=("parallel", "parallel"),
            vmem_limit_bytes=48 * 1024 * 1024,
        ),
    )(patches_t, w_a, w_b, b_a, b_b)

    # Drop pixel padding; output is already channel-major -> NCHW for free.
    return out[:, :, :HW].reshape(B, Cout, Ho, Wo)


# --------------------------------------------------------------------------- #
# Linear + MFM  (type != 1 branch of the module)
# --------------------------------------------------------------------------- #
def mfm_linear_kernel(x_ref, wa_ref, wb_ref, ba_ref, bb_ref, o_ref):
    """x_ref: (TN, Cin); w*: (Cin, Cout); b*: (1, Cout); o_ref: (TN, Cout)."""
    x = x_ref[...]
    a = jnp.dot(x, wa_ref[...], preferred_element_type=jnp.float32) + ba_ref[...]
    b = jnp.dot(x, wb_ref[...], preferred_element_type=jnp.float32) + bb_ref[...]
    o_ref[...] = jnp.maximum(a, b).astype(o_ref.dtype)


def mfm_linear_forward(x, w, bias, *, compute_dtype=None, max_n_tile=512):
    """PyTorch-style interface: x (N, Cin), w (2*Cout, Cin) -> (N, Cout)."""
    N, Cin = x.shape
    Cout2, _ = w.shape
    Cout = Cout2 // 2
    out_dtype = x.dtype

    w_a = jnp.transpose(w[:Cout])                  # (Cin, Cout)
    w_b = jnp.transpose(w[Cout:])
    b_a = bias[:Cout].reshape(1, Cout).astype(jnp.float32)
    b_b = bias[Cout:].reshape(1, Cout).astype(jnp.float32)

    if compute_dtype is not None:
        x = x.astype(compute_dtype)
        w_a = w_a.astype(compute_dtype)
        w_b = w_b.astype(compute_dtype)

    tn = min(_round_up(N, 8), max_n_tile)
    n_pad = _round_up(N, tn)
    if n_pad != N:
        x = jnp.pad(x, ((0, n_pad - N), (0, 0)))

    out = pl.pallas_call(
        mfm_linear_kernel,
        out_shape=jax.ShapeDtypeStruct((n_pad, Cout), out_dtype),
        grid=(n_pad // tn,),
        in_specs=[
            pl.BlockSpec((tn, Cin), lambda i: (i, 0)),
            pl.BlockSpec((Cin, Cout), lambda i: (0, 0)),
            pl.BlockSpec((Cin, Cout), lambda i: (0, 0)),
            pl.BlockSpec((1, Cout), lambda i: (0, 0)),
            pl.BlockSpec((1, Cout), lambda i: (0, 0)),
        ],
        out_specs=pl.BlockSpec((tn, Cout), lambda i: (i, 0)),
        compiler_params=pltpu.CompilerParams(
            dimension_semantics=("parallel",),
        ),
    )(x, w_a, w_b, b_a, b_b)

    return out[:N]


# --------------------------------------------------------------------------- #
if __name__ == "__main__":
    key = jax.random.PRNGKey(0)
    kx, kw, kb, klx, klw, klb = jax.random.split(key, 6)

    # ---- Conv path (module default: mfm(in_channels=4, out_channels=8)) ----
    B, Cin, H, W = 2, 4, 16, 16
    Cout = 8
    KH = KW = 3

    x = jax.random.normal(kx, (B, Cin, H, W), dtype=jnp.float32)
    fan_in = Cin * KH * KW
    w = jax.random.normal(kw, (2 * Cout, Cin, KH, KW), dtype=jnp.float32) / jnp.sqrt(fan_in)
    b = jax.random.normal(kb, (2 * Cout,), dtype=jnp.float32) * 0.1

    out = jax.block_until_ready(mfm_conv_forward(x, w, b))
    assert out.shape == (B, Cout, H, W)

    y_ref = jax.lax.conv_general_dilated(
        x, w, window_strides=(1, 1), padding=((1, 1), (1, 1)),
        dimension_numbers=("NCHW", "OIHW", "NCHW")) + b.reshape(1, -1, 1, 1)
    ref = jnp.maximum(y_ref[:, :Cout], y_ref[:, Cout:])
    assert jnp.allclose(out, ref, atol=2e-4, rtol=2e-4), "conv f32 mismatch vs reference"

    # bf16-operand run (the v6e/v7x fast path for deeper LightCNN layers).
    out_bf16 = jax.block_until_ready(
        mfm_conv_forward(x, w, b, compute_dtype=jnp.bfloat16))
    assert out_bf16.shape == (B, Cout, H, W)
    assert jnp.allclose(out_bf16, ref, atol=5e-2, rtol=0.0), "conv bf16 mismatch vs reference"

    # ---- Linear path (type != 1 branch) -------------------------------------
    N, Fin, Fout = 8, 32, 16
    xl = jax.random.normal(klx, (N, Fin), dtype=jnp.float32)
    wl = jax.random.normal(klw, (2 * Fout, Fin), dtype=jnp.float32) / jnp.sqrt(Fin)
    bl = jax.random.normal(klb, (2 * Fout,), dtype=jnp.float32) * 0.1

    out_l = jax.block_until_ready(mfm_linear_forward(xl, wl, bl))
    yl_ref = xl @ wl.T + bl
    ref_l = jnp.maximum(yl_ref[:, :Fout], yl_ref[:, Fout:])
    assert out_l.shape == (N, Fout)
    assert jnp.allclose(out_l, ref_l, atol=2e-4, rtol=2e-4), "linear f32 mismatch vs reference"

    print("KERNEL_OK")
</pallas_src>

<mosaic_0001>
module attributes {stable_mosaic.version = 11 : i64} {
  func.func @mfm_conv_kernel(%arg0: i32, %arg1: i32, %arg2: memref<1x36x256xf32, #tpu.memory_space<vmem>>, %arg3: memref<8x36xf32, #tpu.memory_space<vmem>>, %arg4: memref<8x36xf32, #tpu.memory_space<vmem>>, %arg5: memref<8x1xf32, #tpu.memory_space<vmem>>, %arg6: memref<8x1xf32, #tpu.memory_space<vmem>>, %arg7: memref<1x8x256xf32, #tpu.memory_space<vmem>>) attributes {dimension_semantics = [#tpu.dimension_semantics<parallel>, #tpu.dimension_semantics<parallel>], iteration_bounds = array<i64: 2, 1>, scalar_prefetch = 0 : i64, scratch_operands = 0 : i64, tpu.core_type = #tpu.core_type<tc>, window_params = [{transform_indices = @transform_0, window_bounds = array<i64: 1, 36, 256>}, {pipeline_mode = #tpu.pipeline_mode<synchronous>, transform_indices = @transform_1, window_bounds = array<i64: 8, 36>}, {pipeline_mode = #tpu.pipeline_mode<synchronous>, transform_indices = @transform_2, window_bounds = array<i64: 8, 36>}, {pipeline_mode = #tpu.pipeline_mode<synchronous>, transform_indices = @transform_3, window_bounds = array<i64: 8, 1>}, {pipeline_mode = #tpu.pipeline_mode<synchronous>, transform_indices = @transform_4, window_bounds = array<i64: 8, 1>}, {transform_indices = @transform_5, window_bounds = array<i64: 1, 8, 256>}]} {
    %c0 = arith.constant 0 : index
    %c0_0 = arith.constant 0 : index
    %c0_1 = arith.constant 0 : index
    %0 = vector.load %arg2[%c0, %c0_0, %c0_1] : memref<1x36x256xf32, #tpu.memory_space<vmem>>, vector<1x36x256xf32>
    %1 = vector.shape_cast %0 : vector<1x36x256xf32> to vector<36x256xf32>
    %c0_2 = arith.constant 0 : index
    %c0_3 = arith.constant 0 : index
    %2 = vector.load %arg3[%c0_2, %c0_3] : memref<8x36xf32, #tpu.memory_space<vmem>>, vector<8x36xf32>
    %cst = arith.constant dense<0.000000e+00> : vector<8x256xf32>
    %3 = tpu.matmul %2, %1, %cst {dimension_numbers = #tpu.dot_dimension_numbers<[1], [0], [0], [1], [0, 0, 1, 1], [], []>} : vector<8x36xf32>, vector<36x256xf32>, vector<8x256xf32> -> vector<8x256xf32>
    %c0_4 = arith.constant 0 : index
    %c0_5 = arith.constant 0 : index
    %4 = vector.load %arg5[%c0_4, %c0_5] : memref<8x1xf32, #tpu.memory_space<vmem>>, vector<8x1xf32>
    %5 = vector.broadcast %4 : vector<8x1xf32> to vector<8x256xf32>
    %6 = arith.addf %3, %5 : vector<8x256xf32>
    %c0_6 = arith.constant 0 : index
    %c0_7 = arith.constant 0 : index
    %7 = vector.load %arg4[%c0_6, %c0_7] : memref<8x36xf32, #tpu.memory_space<vmem>>, vector<8x36xf32>
    %cst_8 = arith.constant dense<0.000000e+00> : vector<8x256xf32>
    %8 = tpu.matmul %7, %1, %cst_8 {dimension_numbers = #tpu.dot_dimension_numbers<[1], [0], [0], [1], [0, 0, 1, 1], [], []>} : vector<8x36xf32>, vector<36x256xf32>, vector<8x256xf32> -> vector<8x256xf32>
    %c0_9 = arith.constant 0 : index
    %c0_10 = arith.constant 0 : index
    %9 = vector.load %arg6[%c0_9, %c0_10] : memref<8x1xf32, #tpu.memory_space<vmem>>, vector<8x1xf32>
    %10 = vector.broadcast %9 : vector<8x1xf32> to vector<8x256xf32>
    %11 = arith.addf %8, %10 : vector<8x256xf32>
    %12 = arith.maximumf %6, %11 : vector<8x256xf32>
    %c0_11 = arith.constant 0 : index
    %c0_12 = arith.constant 0 : index
    %c0_13 = arith.constant 0 : index
    %13 = vector.load %arg7[%c0_11, %c0_12, %c0_13] : memref<1x8x256xf32, #tpu.memory_space<vmem>>, vector<1x8x256xf32>
    %14 = vector.shape_cast %13 : vector<1x8x256xf32> to vector<8x256xf32>
    %15 = vector.shape_cast %12 : vector<8x256xf32> to vector<1x8x256xf32>
    tpu.vector_store %arg7[%c0_11, %c0_12, %c0_13], %15 {strides = array<i32>} : memref<1x8x256xf32, #tpu.memory_space<vmem>>, vector<1x8x256xf32>,
    return
  }
  func.func @transform_0(%arg0: i32, %arg1: i32) -> (i32, i32, i32) {
    %c0_i32 = arith.constant 0 : i32
    %c0_i32_0 = arith.constant 0 : i32
    return %arg0, %c0_i32, %arg1 : i32, i32, i32
  }
  func.func @transform_1(%arg0: i32, %arg1: i32) -> (i32, i32) {
    %c0_i32 = arith.constant 0 : i32
    %c0_i32_0 = arith.constant 0 : i32
    %c0_i32_1 = arith.constant 0 : i32
    return %c0_i32, %c0_i32_0 : i32, i32
  }
  func.func @transform_2(%arg0: i32, %arg1: i32) -> (i32, i32) {
    %c0_i32 = arith.constant 0 : i32
    %c0_i32_0 = arith.constant 0 : i32
    %c0_i32_1 = arith.constant 0 : i32
    return %c0_i32, %c0_i32_0 : i32, i32
  }
  func.func @transform_3(%arg0: i32, %arg1: i32) -> (i32, i32) {
    %c0_i32 = arith.constant 0 : i32
    %c0_i32_0 = arith.constant 0 : i32
    %c0_i32_1 = arith.constant 0 : i32
    return %c0_i32, %c0_i32_0 : i32, i32
  }
  func.func @transform_4(%arg0: i32, %arg1: i32) -> (i32, i32) {
    %c0_i32 = arith.constant 0 : i32
    %c0_i32_0 = arith.constant 0 : i32
    %c0_i32_1 = arith.constant 0 : i32
    return %c0_i32, %c0_i32_0 : i32, i32
  }
  func.func @transform_5(%arg0: i32, %arg1: i32) -> (i32, i32, i32) {
    %c0_i32 = arith.constant 0 : i32
    %c0_i32_0 = arith.constant 0 : i32
    return %arg0, %c0_i32, %arg1 : i32, i32, i32
  }
}

</mosaic_0001>

<llo_original>
// kernel: tpu_custom_call.1
$region0: #{tpu_custom_call.1}
  #allocation0 [shape = 'u32[]', space=smem, size = 0x4, offset = 0x4, fixed_abs, tag = 'smem constant byte address 0x4 - core index']
  #allocation1 [shape = 'u32[144,128]{1,0:T(1,128)}', space=vmem, size = 0x12000, scoped, tag = 'internal scratch']
  %s0 = inlined_call_operand.vmem [shape: f32[2,36,256], index: 0, kind: input, shape index: {}]
  %s1 = inlined_call_operand.vmem [shape: f32[8,36], index: 1, kind: input, shape index: {}]
  %s2 = inlined_call_operand.vmem [shape: f32[8,36], index: 2, kind: input, shape index: {}]
  %s3 = inlined_call_operand.vmem [shape: f32[8,1], index: 3, kind: input, shape index: {}]
  %s4 = inlined_call_operand.vmem [shape: f32[8,1], index: 4, kind: input, shape index: {}]
  %s5 = inlined_call_operand.hbm [shape: f32[2,8,256], index: 5, kind: output, shape index: {}]
  %s6 = sld [smem:[#allocation0]]
  $region53: #{tpu_custom_call.1} parent=0
    _
  %s8 = ssub.s32 1, %s6
  %s9 = scalar_select 0, %s8, %s6
  $region1: #{tpu_custom_call.1} parent=0
    #allocation2 [shape = 'u8[16384]{0}', space=vmem, size = 0x4000, scoped, tag = 'output window, operand 0']
    #allocation3 [shape = 's32[2]{0}', space=sflag, size = 0x8, scoped, tag = 'scoped memory for tpu_custom_call.1']
    %10 = vsyncpa [#allocation3], 0
    %s11 = scalar_lea.sflag [#allocation3], 1
    %12 = vsyncpa %s11, 0
    loop: start=0, step=1, limit=4
    $region2: #{tpu_custom_call.1} parent=1 // loop_pre_header
      _
    $region3: #{tpu_custom_call.1} parent=1 // loop_header
      %s14 = sphi 0, %s18
      %p15 = scmp.ge.s32.totalorder %s14, 4
      %s21 = sphi 0, %s33
      %s22 = sphi 0, %s29
      %s23 = sphi 0, %s21
      %s24 = sphi 0, %s22
      %s25 = sphi 0, %s23
      %s26 = sphi 0, %s24
      %s38 = sphi 0, %s40
      %s41 = sphi 0, %s38
      %s42 = sphi 0, %s41
      %s58 = sphi 0, %s42
      %s62 = sphi 0, %s62
      %s64 = sphi 0, %s62
      %s65 = sphi 0, %s64
      %s79 = sphi 0, %s65
      %s83 = sphi 0, %s83
      %s85 = sphi 0, %s83
      %s86 = sphi 0, %s85
      %s100 = sphi 0, %s86
      %s104 = sphi 0, %s104
      %s106 = sphi 0, %s104
      %s107 = sphi 0, %s106
      %s121 = sphi 0, %s107
      %s125 = sphi 0, %s125
      %s127 = sphi 0, %s125
      %s128 = sphi 0, %s127
      %s142 = sphi 0, %s128
      %s150 = sphi 0, %s152
      %s153 = sphi 0, %s150
      %s154 = sphi 0, %s153
      %s170 = sphi 0, %s154
    $region4: #{tpu_custom_call.1} parent=1 // loop_header_branch
      %17 = sbr.rel (%p15) target = $region8
    $region5: #{tpu_custom_call.1} parent=1 // loop_body
      %s19 = ssub.s32 %s14, 1
      %s20 = ssub.s32 %s14, 2
      %s27 = sadd.s32 1, %s22
      %p28 = scmp.ge.s32.totalorder %s27, 1
      %s29 = scalar_select %p28, 0, %s27
      %s30 = sadd.s32 1, %s21
      %s31 = scalar_select %p28, %s30, %s21
      %p32 = scmp.ge.s32.totalorder %s31, 2
      %s33 = scalar_select %p32, 0, %s31
      %s34 = ssub.s32 %s21, %s33
      %s35 = ssub.s32 %s22, %s29
      %s36 = sor.u32 %s34, %s35
      %p37 = scmp.eq.s32.totalorder %s36, 0
      %s39 = sadd.s32 %s38, 1
      %s40 = scalar_select %p37, %s38, %s39
      %p43 = pneg %p37
      %p44 = scmp.eq.s32.totalorder %s14, 1
      %p45 = por %p43, %p44
      %p46 = scmp.ne.s32.totalorder %s38, %s41
      %p47 = scmp.eq.s32.totalorder %s14, 0
      %p48 = por %p46, %p47
      %p49 = scmp.ne.s32.totalorder %s38, %s41
      %p50 = scmp.eq.s32.totalorder %s19, 1
      %p51 = por %p49, %p50
      %p52 = scmp.ne.s32.totalorder %s41, %s42
      %p53 = scmp.eq.s32.totalorder %s19, 0
      %p54 = por %p52, %p53
      %p55 = scmp.ne.s32.totalorder %s41, %s42
      %p56 = scmp.eq.s32.totalorder %s20, 1
      %p57 = por %p55, %p56
      %p59 = scmp.ne.s32.totalorder %s42, %s58
      %p60 = scmp.eq.s32.totalorder %s20, 0
      %p61 = por %p59, %p60
      %s63 = sadd.s32 %s62, 1
      %p66 = scmp.eq.s32.totalorder %s14, 1
      %p67 = scmp.ne.s32.totalorder %s62, %s64
      %p68 = scmp.eq.s32.totalorder %s14, 0
      %p69 = por %p67, %p68
      %p70 = scmp.ne.s32.totalorder %s62, %s64
      %p71 = scmp.eq.s32.totalorder %s19, 1
      %p72 = por %p70, %p71
      %p73 = scmp.ne.s32.totalorder %s64, %s65
      %p74 = scmp.eq.s32.totalorder %s19, 0
      %p75 = por %p73, %p74
      %p76 = scmp.ne.s32.totalorder %s64, %s65
      %p77 = scmp.eq.s32.totalorder %s20, 1
      %p78 = por %p76, %p77
      %p80 = scmp.ne.s32.totalorder %s65, %s79
      %p81 = scmp.eq.s32.totalorder %s20, 0
      %p82 = por %p80, %p81
      %s84 = sadd.s32 %s83, 1
      %p87 = scmp.eq.s32.totalorder %s14, 1
      %p88 = scmp.ne.s32.totalorder %s83, %s85
      %p89 = scmp.eq.s32.totalorder %s14, 0
      %p90 = por %p88, %p89
      %p91 = scmp.ne.s32.totalorder %s83, %s85
      %p92 = scmp.eq.s32.totalorder %s19, 1
      %p93 = por %p91, %p92
      %p94 = scmp.ne.s32.totalorder %s85, %s86
      %p95 = scmp.eq.s32.totalorder %s19, 0
      %p96 = por %p94, %p95
      %p97 = scmp.ne.s32.totalorder %s85, %s86
      %p98 = scmp.eq.s32.totalorder %s20, 1
      %p99 = por %p97, %p98
      %p101 = scmp.ne.s32.totalorder %s86, %s100
      %p102 = scmp.eq.s32.totalorder %s20, 0
      %p103 = por %p101, %p102
      %s105 = sadd.s32 %s104, 1
      %p108 = scmp.eq.s32.totalorder %s14, 1
      %p109 = scmp.ne.s32.totalorder %s104, %s106
      %p110 = scmp.eq.s32.totalorder %s14, 0
      %p111 = por %p109, %p110
      %p112 = scmp.ne.s32.totalorder %s104, %s106
      %p113 = scmp.eq.s32.totalorder %s19, 1
      %p114 = por %p112, %p113
      %p115 = scmp.ne.s32.totalorder %s106, %s107
      %p116 = scmp.eq.s32.totalorder %s19, 0
      %p117 = por %p115, %p116
      %p118 = scmp.ne.s32.totalorder %s106, %s107
      %p119 = scmp.eq.s32.totalorder %s20, 1
      %p120 = por %p118, %p119
      %p122 = scmp.ne.s32.totalorder %s107, %s121
      %p123 = scmp.eq.s32.totalorder %s20, 0
      %p124 = por %p122, %p123
      %s126 = sadd.s32 %s125, 1
      %p129 = scmp.eq.s32.totalorder %s14, 1
      %p130 = scmp.ne.s32.totalorder %s125, %s127
      %p131 = scmp.eq.s32.totalorder %s14, 0
      %p132 = por %p130, %p131
      %p133 = scmp.ne.s32.totalorder %s125, %s127
      %p134 = scmp.eq.s32.totalorder %s19, 1
      %p135 = por %p133, %p134
      %p136 = scmp.ne.s32.totalorder %s127, %s128
      %p137 = scmp.eq.s32.totalorder %s19, 0
      %p138 = por %p136, %p137
      %p139 = scmp.ne.s32.totalorder %s127, %s128
      %p140 = scmp.eq.s32.totalorder %s20, 1
      %p141 = por %p139, %p140
      %p143 = scmp.ne.s32.totalorder %s128, %s142
      %p144 = scmp.eq.s32.totalorder %s20, 0
      %p145 = por %p143, %p144
      %s146 = ssub.s32 %s21, %s33
      %s147 = ssub.s32 %s22, %s29
      %s148 = sor.u32 %s146, %s147
      %p149 = scmp.eq.s32.totalorder %s148, 0
      %s151 = sadd.s32 %s150, 1
      %s152 = scalar_select %p149, %s150, %s151
      %p155 = pneg %p149
      %p156 = scmp.eq.s32.totalorder %s14, 1
      %p157 = por %p155, %p156
      %p158 = scmp.ne.s32.totalorder %s150, %s153
      %p159 = scmp.eq.s32.totalorder %s14, 0
      %p160 = por %p158, %p159
      %p161 = scmp.ne.s32.totalorder %s150, %s153
      %p162 = scmp.eq.s32.totalorder %s19, 1
      %p163 = por %p161, %p162
      %p164 = scmp.ne.s32.totalorder %s153, %s154
      %p165 = scmp.eq.s32.totalorder %s19, 0
      %p166 = por %p164, %p165
      %p167 = scmp.ne.s32.totalorder %s153, %s154
      %p168 = scmp.eq.s32.totalorder %s20, 1
      %p169 = por %p167, %p168
      %p171 = scmp.ne.s32.totalorder %s154, %s170
      %p172 = scmp.eq.s32.totalorder %s20, 0
      %p173 = por %p171, %p172
      %p174 = scmp.le.s32.totalorder 1, %s14
      %p175 = scmp.lt.s32.totalorder %s14, 3
      %p176 = pnand %p174, %p175
      %p177 = pneg %p176
      // Predicated region
      $region9: #{tpu_custom_call.1} parent=5 // pred_check
        _
      $region10: #{tpu_custom_call.1} parent=5 // pred_check_branch
        %179 = sbr.rel (%p176) target = $region12
      $region11: #{tpu_custom_call.1} parent=5 // pred_region
        %s180 = ssub.s32 %s14, 1
        // Predicated region
        $region13: #{tpu_custom_call.1} parent=11 // pred_check
          %p181 = pneg %p75
        $region14: #{tpu_custom_call.1} parent=11 // pred_check_branch
          %183 = sbr.rel (%p181) target = $region16
        $region15: #{tpu_custom_call.1} parent=11 // pred_region
          _
        $region16: #{tpu_custom_call.1} parent=11 // pred_fallthru
          _
        // Predicated region
        $region17: #{tpu_custom_call.1} parent=11 // pred_check
          %p184 = pneg %p96
        $region18: #{tpu_custom_call.1} parent=11 // pred_check_branch
          %186 = sbr.rel (%p184) target = $region20
        $region19: #{tpu_custom_call.1} parent=11 // pred_region
          _
        $region20: #{tpu_custom_call.1} parent=11 // pred_fallthru
          _
        // Predicated region
        $region21: #{tpu_custom_call.1} parent=11 // pred_check
          %p187 = pneg %p117
        $region22: #{tpu_custom_call.1} parent=11 // pred_check_branch
          %189 = sbr.rel (%p187) target = $region24
        $region23: #{tpu_custom_call.1} parent=11 // pred_region
          _
        $region24: #{tpu_custom_call.1} parent=11 // pred_fallthru
          _
        // Predicated region
        $region25: #{tpu_custom_call.1} parent=11 // pred_check
          %p190 = pneg %p138
        $region26: #{tpu_custom_call.1} parent=11 // pred_check_branch
          %192 = sbr.rel (%p190) target = $region28
        $region27: #{tpu_custom_call.1} parent=11 // pred_region
          _
        $region28: #{tpu_custom_call.1} parent=11 // pred_fallthru
          _
      $region12: #{tpu_custom_call.1} parent=5 // pred_fallthru
        _
      %p193 = scmp.lt.s32.totalorder %s14, 2
      // Predicated region
      $region29: #{tpu_custom_call.1} parent=5 // pred_check
        %p194 = pneg %p193
      $region30: #{tpu_custom_call.1} parent=5 // pred_check_branch
        %196 = sbr.rel (%p194) target = $region32
      $region31: #{tpu_custom_call.1} parent=5 // pred_region
        // Predicated region
        $region33: #{tpu_custom_call.1} parent=31 // pred_check
          %p197 = pneg %p48
        $region34: #{tpu_custom_call.1} parent=31 // pred_check_branch
          %199 = sbr.rel (%p197) target = $region36
        $region35: #{tpu_custom_call.1} parent=31 // pred_region
          %s200 = smul.u32 2, %s22
          %p201 = scmp.lt.s32.totalorder %s21, 1
          %s202 = scalar_select %p201, %s21, 1
          %p203 = scmp.lt.s32.totalorder %s200, 1
          %s204 = scalar_select %p203, %s200, 1
          %s205 = smul.addr %s202, 10
          %s206 = sadd.s32 %s204, %s205
          %s207 = smul.addr %s206, 8
          %s208 = scalar_lea.vmem %s0, %s207
          %s209 = smul.u32 2, %s22
        $region36: #{tpu_custom_call.1} parent=31 // pred_fallthru
          _
      $region32: #{tpu_custom_call.1} parent=5 // pred_fallthru
        _
      %p210 = scmp.le.s32.totalorder 1, %s14
      %p211 = scmp.lt.s32.totalorder %s14, 3
      %p212 = pnand %p210, %p211
      %p213 = pneg %p212
      // Predicated region
      $region37: #{tpu_custom_call.1} parent=5 // pred_check
        _
      $region38: #{tpu_custom_call.1} parent=5 // pred_check_branch
        %215 = sbr.rel (%p212) target = $region40
      $region39: #{tpu_custom_call.1} parent=5 // pred_region
        %s216 = ssub.s32 %s14, 1
        %s217 = smul.u32 2, %s24
        %p218 = scmp.lt.s32.totalorder %s23, 1
        %s219 = scalar_select %p218, %s23, 1
        %p220 = scmp.lt.s32.totalorder %s217, 1
        %s221 = scalar_select %p220, %s217, 1
        %s222 = smul.addr %s219, 10
        %s223 = sadd.s32 %s221, %s222
        %s224 = smul.addr %s223, 8
        %s225 = scalar_lea.vmem %s0, %s224
        %p226 = pneg %p54
        %p227 = pneg %p51
        %p228 = pneg %p75
        %p229 = pneg %p72
        %p230 = pneg %p96
        %p231 = pneg %p93
        %p232 = pneg %p117
        %p233 = pneg %p114
        %p234 = pneg %p138
        %p235 = pneg %p135
        %p236 = pneg %p166
        %p237 = pneg %p163
        %s238 = sand.u32 %s153, 1
        %s239 = scalar_lea.sflag [#allocation3], %s238
        %s240 = sand.u32 %s153, 1
        %s241 = smul.addr %s240, 16
        %s242 = scalar_lea.vmem [#allocation2], %s241
        %s243 = smul.u32 2, %s24
        %p244 = scmp.lt.s32.totalorder %s23, 1
        %s245 = scalar_select %p244, %s23, 1
        %p246 = scmp.lt.s32.totalorder %s243, 1
        %s247 = scalar_select %p246, %s243, 1
        %s248 = smul.addr %s245, 10
        %s249 = sadd.s32 %s247, %s248
        %s250 = smul.addr %s249, 8
        %s251 = scalar_lea.vmem %s0, %s250
        %s252 = smul.u32 2, %s24
        %s253 = smul.u32 2, %s24
        %v254 = vld [vmem:[%s251] sm:$0xff]
        %v255 = vld [vmem:[%s251 + $0x8] sm:$0xff]
        %v256 = vld [vmem:[%s251 + $0x10] sm:$0xff]
        %v257 = vld [vmem:[%s251 + $0x18] sm:$0xff]
        %v258 = vld [vmem:[%s251 + $0x20] sm:$0xff]
        %v259 = vld [vmem:[%s251 + $0x28] sm:$0xff]
        %v260 = vld [vmem:[%s251 + $0x30] sm:$0xff]
        %v261 = vld [vmem:[%s251 + $0x38] sm:$0xff]
        %v262 = vld [vmem:[%s251 + $0x40] sm:$0xf]
        %v263 = vld [vmem:[%s251 + $0x48] sm:$0xf]
        %v264 = vld [vmem:[%s1] sm:$0xff]
        %v265 = vld [vmem:[%s3] sm:$0xff]
        %267 = vset.pattern.permute.xlu0 0
        %268 = vperm.xlu0 %267, %v265
        %v269 = vpop.permute.xlu0 %268
        %vm271 = vcmask 293888
        %v273 = vsel %vm271, %v264, 0
        %vm275 = vcmask 1043456
        %v277 = vsel %vm275, %v262, 0
        %v280 = vsel %vm275, %v263, 0
        %282 = vmatprep.subr.mxu0 0.0
        %283 = vmatpush1.msra.mxu0 0.0
        %284 = vmatprep.subr.mxu0 0.0
        %285 = vmatpush1.msra.mxu0 0.0
        %286 = vmatprep.subr.mxu0 0.0
        %287 = vmatpush1.msra.mxu0 0.0
        %288 = vmatprep.subr.mxu0 0.0
        %289 = vmatpush1.msra.mxu0 0.0
        %290 = vmatprep.subr.mxu0 0.0
        %291 = vmatpush1.msra.mxu0 0.0
        %292 = vmatprep.subr.mxu0 0.0
        %293 = vmatpush1.msra.mxu0 0.0
        %294 = vmatprep.subr.mxu0 0.0
        %295 = vmatpush1.msra.mxu0 0.0
        %296 = vmatprep.subr.mxu0 0.0
        %297 = vmatpush1.msra.mxu0 0.0
        %298 = vmatprep.subr.mxu0 0.0
        %299 = vmatpush1.msra.mxu0 0.0
        %300 = vmatprep.subr.mxu0 0.0
        %301 = vmatpush1.msra.mxu0 0.0
        %302 = vmatprep.subr.mxu0 0.0
        %303 = vmatpush1.msra.mxu0 0.0
        %304 = vmatprep.subr.mxu0 %v280
        %305 = vmatpush1.msra.mxu0 %v277
        %306 = vmatprep.subr.mxu0 %v261
        %307 = vmatpush1.msra.mxu0 %v260
        %308 = vmatprep.subr.mxu0 %v259
        %309 = vmatpush1.msra.mxu0 %v258
        %310 = vmatprep.subr.mxu0 %v257
        %311 = vmatpush1.msra.mxu0 %v256
        %312 = vmatprep.subr.mxu0 %v255
        %313 = vmatpush1.msra.mxu0 %v254
        %314 = vmatprep.subr.mxu0 0.0
        %315 = vmatpush2.msra.mxu0 0.0
        %316 = vmatprep.subr.mxu0 0.0
        %317 = vmatpush2.msra.mxu0 0.0
        %318 = vmatprep.subr.mxu0 0.0
        %319 = vmatpush2.msra.mxu0 0.0
        %320 = vmatprep.subr.mxu0 0.0
        %321 = vmatpush2.msra.mxu0 0.0
        %322 = vmatprep.subr.mxu0 0.0
        %323 = vmatpush2.msra.mxu0 0.0
        %324 = vmatprep.subr.mxu0 0.0
        %325 = vmatpush2.msra.mxu0 0.0
        %326 = vmatprep.subr.mxu0 0.0
        %327 = vmatpush2.msra.mxu0 0.0
        %328 = vmatprep.subr.mxu0 0.0
        %329 = vmatpush2.msra.mxu0 0.0
        %330 = vmatprep.subr.mxu0 0.0
        %331 = vmatpush2.msra.mxu0 0.0
        %332 = vmatprep.subr.mxu0 0.0
        %333 = vmatpush2.msra.mxu0 0.0
        %334 = vmatprep.subr.mxu0 0.0
        %335 = vmatpush2.msra.mxu0 0.0
        %336 = vmatprep.subr.mxu0 0.0
        %337 = vmatpush2.msra.mxu0 0.0
        %338 = vmatprep.subr.mxu0 0.0
        %339 = vmatpush2.msra.mxu0 0.0
        %340 = vmatprep.subr.mxu0 0.0
        %341 = vmatpush2.msra.mxu0 0.0
        %342 = vmatprep.subr.mxu0 0.0
        %343 = vmatpush2.msra.mxu0 0.0
        %344 = vmatprep.subr.mxu0 0.0
        %345 = vmatpush2.msra.mxu0 0.0
        %346 = vmatprep.mubr.f32.mxu0 0.0
        %347 = vmatmul.mubr.f32.gmra.mxu0 %v273
        %v348 = vpop.f32.mrf.mxu0
        %v349 = vadd.f32 %v269, %v348
        %v350 = vpop.f32.mrf.mxu0
        %v351 = vadd.f32 %v269, %v350
        %352 = vdwg.mxu0
        %v353 = vld [vmem:[%s2] sm:$0xff]
        %v354 = vld [vmem:[%s4] sm:$0xff]
        %356 = vset.pattern.permute.xlu0 0
        %357 = vperm.xlu0 %356, %v354
        %v358 = vpop.permute.xlu0 %357
        %v361 = vsel %vm271, %v353, 0
        %363 = vmatprep.subr.mxu0 0.0
        %364 = vmatpush1.msra.mxu0 0.0
        %365 = vmatprep.subr.mxu0 0.0
        %366 = vmatpush1.msra.mxu0 0.0
        %367 = vmatprep.subr.mxu0 0.0
        %368 = vmatpush1.msra.mxu0 0.0
        %369 = vmatprep.subr.mxu0 0.0
        %370 = vmatpush1.msra.mxu0 0.0
        %371 = vmatprep.subr.mxu0 0.0
        %372 = vmatpush1.msra.mxu0 0.0
        %373 = vmatprep.subr.mxu0 0.0
        %374 = vmatpush1.msra.mxu0 0.0
        %375 = vmatprep.subr.mxu0 0.0
        %376 = vmatpush1.msra.mxu0 0.0
        %377 = vmatprep.subr.mxu0 0.0
        %378 = vmatpush1.msra.mxu0 0.0
        %379 = vmatprep.subr.mxu0 0.0
        %380 = vmatpush1.msra.mxu0 0.0
        %381 = vmatprep.subr.mxu0 0.0
        %382 = vmatpush1.msra.mxu0 0.0
        %383 = vmatprep.subr.mxu0 0.0
        %384 = vmatpush1.msra.mxu0 0.0
        %385 = vmatprep.subr.mxu0 %v280
        %386 = vmatpush1.msra.mxu0 %v277
        %387 = vmatprep.subr.mxu0 %v261
        %388 = vmatpush1.msra.mxu0 %v260
        %389 = vmatprep.subr.mxu0 %v259
        %390 = vmatpush1.msra.mxu0 %v258
        %391 = vmatprep.subr.mxu0 %v257
        %392 = vmatpush1.msra.mxu0 %v256
        %393 = vmatprep.subr.mxu0 %v255
        %394 = vmatpush1.msra.mxu0 %v254
        %395 = vmatprep.subr.mxu0 0.0
        %396 = vmatpush2.msra.mxu0 0.0
        %397 = vmatprep.subr.mxu0 0.0
        %398 = vmatpush2.msra.mxu0 0.0
        %399 = vmatprep.subr.mxu0 0.0
        %400 = vmatpush2.msra.mxu0 0.0
        %401 = vmatprep.subr.mxu0 0.0
        %402 = vmatpush2.msra.mxu0 0.0
        %403 = vmatprep.subr.mxu0 0.0
        %404 = vmatpush2.msra.mxu0 0.0
        %405 = vmatprep.subr.mxu0 0.0
        %406 = vmatpush2.msra.mxu0 0.0
        %407 = vmatprep.subr.mxu0 0.0
        %408 = vmatpush2.msra.mxu0 0.0
        %409 = vmatprep.subr.mxu0 0.0
        %410 = vmatpush2.msra.mxu0 0.0
        %411 = vmatprep.subr.mxu0 0.0
        %412 = vmatpush2.msra.mxu0 0.0
        %413 = vmatprep.subr.mxu0 0.0
        %414 = vmatpush2.msra.mxu0 0.0
        %415 = vmatprep.subr.mxu0 0.0
        %416 = vmatpush2.msra.mxu0 0.0
        %417 = vmatprep.subr.mxu0 0.0
        %418 = vmatpush2.msra.mxu0 0.0
        %419 = vmatprep.subr.mxu0 0.0
        %420 = vmatpush2.msra.mxu0 0.0
        %421 = vmatprep.subr.mxu0 0.0
        %422 = vmatpush2.msra.mxu0 0.0
        %423 = vmatprep.subr.mxu0 0.0
        %424 = vmatpush2.msra.mxu0 0.0
        %425 = vmatprep.subr.mxu0 0.0
        %426 = vmatpush2.msra.mxu0 0.0
        %427 = vmatprep.mubr.f32.mxu0 0.0
        %428 = vmatmul.mubr.f32.gmra.mxu0 %v361
        %v429 = vpop.f32.mrf.mxu0
        %v430 = vadd.f32 %v358, %v429
        %v431 = vpop.f32.mrf.mxu0
        %v432 = vadd.f32 %v358, %v431
        %433 = vdwg.mxu0
        %v434 = vmax.f32 %v349, %v430
        %v435 = vmax.f32 %v351, %v432
        %436 = vst [vmem:[%s242] sm:$0xff] %v434
        %437 = vst [vmem:[%s242 + $0x8] sm:$0xff] %v435
        %s438 = sand.u32 %s153, 1
        %s439 = scalar_lea.sflag [#allocation3], %s438
        %s440 = sand.u32 %s153, 1
        %s441 = smul.addr %s440, 16
        %s442 = scalar_lea.vmem [#allocation2], %s441
        // Predicated region
        $region41: #{tpu_custom_call.1} parent=39 // pred_check
          %p443 = pneg %p163
        $region42: #{tpu_custom_call.1} parent=39 // pred_check_branch
          %445 = sbr.rel (%p443) target = $region44
        $region43: #{tpu_custom_call.1} parent=39 // pred_region
          %s446 = smul.u32 2, %s24
          %s448 = ssub.s32 256, 256
          %449 = vsyncadd %s439, %s448
          %s450 = smul.addr %s23, 2
          %s451 = sadd.s32 %s446, %s450
          %s452 = smul.addr %s451, 128
          %s453 = scalar_lea.hbm %s5, %s452
          %s455 = sshll.u32 %s442, 4
          %s456 = int_to_ptr.vmem [resolvable:$true] %s455
          %458 = dma.vmem_to_hbm [thread:$0]  %s456, 256, %s453, %s439
        $region44: #{tpu_custom_call.1} parent=39 // pred_fallthru
          _
      $region40: #{tpu_custom_call.1} parent=5 // pred_fallthru
        _
      %p459 = scmp.le.s32.totalorder 2, %s14
      // Predicated region
      $region45: #{tpu_custom_call.1} parent=5 // pred_check
        %p460 = pneg %p459
      $region46: #{tpu_custom_call.1} parent=5 // pred_check_branch
        %462 = sbr.rel (%p460) target = $region48
      $region47: #{tpu_custom_call.1} parent=5 // pred_region
        %s463 = ssub.s32 %s14, 2
        // Predicated region
        $region49: #{tpu_custom_call.1} parent=47 // pred_check
          %p464 = pneg %p169
        $region50: #{tpu_custom_call.1} parent=47 // pred_check_branch
          %466 = sbr.rel (%p464) target = $region52
        $region51: #{tpu_custom_call.1} parent=47 // pred_region
          %s467 = sand.u32 %s154, 1
          %s468 = scalar_lea.sflag [#allocation3], %s467
          %s469 = sand.u32 %s154, 1
          %s470 = smul.addr %s469, 16
          %s471 = scalar_lea.vmem [#allocation2], %s470
          %472 = dma.done %s468, 256
        $region52: #{tpu_custom_call.1} parent=47 // pred_fallthru
          _
      $region48: #{tpu_custom_call.1} parent=5 // pred_fallthru
        _
    $region6: #{tpu_custom_call.1} parent=1 // loop_footer
      %s18 = sadd.s32 1, %s14
    $region7: #{tpu_custom_call.1} parent=1 // loop_footer_branch
      %13 = sbr.rel target = $region3
    $region8: #{tpu_custom_call.1} parent=1 // loop_exit
      _
    %473 = vsyncpa [#allocation3], 1
    %s474 = scalar_lea.sflag [#allocation3], 1
    %475 = vsyncpa %s474, 1

</llo_original>
